<compile_context>
chip_gen: v7x
topology: tpu7x:2x2x1
jax: 0.10.0
libtpu: 0.0.40
codegen_flags: <defaults>
</compile_context>

<pallas_src>
import functools

import jax
import jax.numpy as jnp
from jax.experimental import pallas as pl
from jax.experimental.pallas import tpu as pltpu


def _kd_loss_kernel(s_ref, t_ref, o_ref, *, inv_T, B, TB, mask_rows):
    i = pl.program_id(0)

    # Temperature-scaled logits (cast happens here, not in the wrapper).
    s = s_ref[...].astype(jnp.float32) * inv_T            # (TB, N) student
    t = t_ref[...].astype(jnp.float32) * inv_T            # (TB, N) teacher

    # Student: only the log-partition-function is needed.
    s_shift = s - jnp.max(s, axis=-1, keepdims=True)
    log_s_sum = jnp.log(jnp.sum(jnp.exp(s_shift), axis=-1, keepdims=True))

    # Teacher softmax pieces (exp shared between q and log q).
    t_shift = t - jnp.max(t, axis=-1, keepdims=True)
    t_exp = jnp.exp(t_shift)
    t_sum = jnp.sum(t_exp, axis=-1, keepdims=True)
    log_t_sum = jnp.log(t_sum)
    inv_t_sum = 1.0 / t_sum                                # exact per-row recip

    # q * (log q - log p) folded:
    #   = (t_exp / t_sum) * ((t_shift - s_shift) + (log_s_sum - log_t_sum))
    elem = (t_exp * inv_t_sum) * (
        (t_shift - s_shift) + (log_s_sum - log_t_sum))     # (TB, N)

    if mask_rows:  # only traced when B % TB != 0 (padded rows in last block)
        row = i * TB + jax.lax.broadcasted_iota(jnp.int32, (TB, 1), 0)
        elem = jnp.where(row < B, elem, 0.0)               # select, not mul

    # Per-block partial sum, broadcast into a fully aligned (1,8,128) tile so
    # the store is unmasked and every grid step is independent ("parallel").
    partial = jnp.sum(elem)
    o_ref[...] = jnp.full(o_ref.shape, partial, dtype=jnp.float32)


def _pick_block_b(B, N, itemsize, target_bytes=2 << 20):
    """Rows per block: ~2 MiB of input per block, dtype-aware row alignment."""
    align = 8 * max(1, 4 // int(itemsize))   # 8 (f32) / 16 (bf16) / 32 (int8)
    tb = (target_bytes // max(N * int(itemsize), 1)) // align * align
    tb = max(tb, align)
    if tb >= B:
        return B            # whole batch in one block (full-dim block is legal)
    return tb               # aligned; last partial block is row-masked


def knowledge_distillation_loss(student_output, teacher_output, T=1.0):
    """student_output, teacher_output: (B, N) logits. Returns scalar f32 loss."""
    assert student_output.shape == teacher_output.shape
    B, N = student_output.shape
    itemsize = jnp.dtype(student_output.dtype).itemsize
    TB = _pick_block_b(B, N, itemsize)
    G = pl.cdiv(B, TB)

    kern = functools.partial(
        _kd_loss_kernel,
        inv_T=1.0 / float(T),
        B=B,
        TB=TB,
        mask_rows=(B % TB != 0),
    )

    partials = pl.pallas_call(
        kern,
        # One (8,128)-aligned f32 tile of partial sums per grid step.
        out_shape=jax.ShapeDtypeStruct((G, 8, 128), jnp.float32),
        grid=(G,),
        in_specs=[
            pl.BlockSpec((TB, N), lambda i: (i, 0)),
            pl.BlockSpec((TB, N), lambda i: (i, 0)),
        ],
        out_specs=pl.BlockSpec((1, 8, 128), lambda i: (i, 0, 0)),
        compiler_params=pltpu.CompilerParams(
            # Independent per-block outputs -> batch axis can be split across
            # TensorCores on v7x; harmless single-TC loop on v5e/v6e.
            dimension_semantics=("parallel",),
            # 2 inputs x 2 pipeline buffers x ~2 MiB + f32 temporaries; safe
            # on v5e/v6e (128 MiB phys) and under v7x's 64 MiB physical VMEM.
            vmem_limit_bytes=48 * 1024 * 1024,
        ),
    )(student_output, teacher_output)

    # batchmean (/B) and * T**2 folded into one static scale; tiny final sum.
    scale = (float(T) ** 2) / float(B)
    return jnp.sum(partials[:, 0, 0]) * scale


def _reference(student, teacher, T):
    # Pure-JAX mirror of the PyTorch forward for a sanity check.
    log_p = jax.nn.log_softmax(student.astype(jnp.float32) / T, axis=1)
    q = jax.nn.softmax(teacher.astype(jnp.float32) / T, axis=1)
    elem = q * (jnp.log(q) - log_p)
    return (jnp.sum(elem) / student.shape[0]) * (T ** 2)


if __name__ == "__main__":
    key = jax.random.PRNGKey(0)
    k1, k2 = jax.random.split(key)

    B, N = 8, 256          # (batch, num_classes) logits; softmax over dim=1
    T = 2.0

    student = jax.random.normal(k1, (B, N), dtype=jnp.float32)
    teacher = jax.random.normal(k2, (B, N), dtype=jnp.float32)

    loss = knowledge_distillation_loss(student, teacher, T=T)
    loss = jax.block_until_ready(loss)

    ref = _reference(student, teacher, T=T)
    assert jnp.allclose(loss, ref, atol=1e-5, rtol=1e-5), (loss, ref)

    print("KERNEL_OK")
</pallas_src>

<mosaic_0001>
module attributes {stable_mosaic.version = 11 : i64} {
  func.func @_kd_loss_kernel(%arg0: i32, %arg1: memref<8x256xf32, #tpu.memory_space<vmem>>, %arg2: memref<8x256xf32, #tpu.memory_space<vmem>>, %arg3: memref<1x8x128xf32, #tpu.memory_space<vmem>>) attributes {dimension_semantics = [#tpu.dimension_semantics<parallel>], iteration_bounds = array<i64: 1>, scalar_prefetch = 0 : i64, scratch_operands = 0 : i64, tpu.core_type = #tpu.core_type<tc>, window_params = [{transform_indices = @transform_0, window_bounds = array<i64: 8, 256>}, {transform_indices = @transform_1, window_bounds = array<i64: 8, 256>}, {transform_indices = @transform_2, window_bounds = array<i64: 1, 8, 128>}]} {
    %c0 = arith.constant 0 : index
    %c0_0 = arith.constant 0 : index
    %0 = vector.load %arg1[%c0, %c0_0] : memref<8x256xf32, #tpu.memory_space<vmem>>, vector<8x256xf32>
    %cst = arith.constant 5.000000e-01 : f32
    %1 = vector.broadcast %cst : f32 to vector<8x256xf32>
    %2 = arith.mulf %0, %1 : vector<8x256xf32>
    %c0_1 = arith.constant 0 : index
    %c0_2 = arith.constant 0 : index
    %3 = vector.load %arg2[%c0_1, %c0_2] : memref<8x256xf32, #tpu.memory_space<vmem>>, vector<8x256xf32>
    %cst_3 = arith.constant 5.000000e-01 : f32
    %4 = vector.broadcast %cst_3 : f32 to vector<8x256xf32>
    %5 = arith.mulf %3, %4 : vector<8x256xf32>
    %cst_4 = arith.constant dense<0xFF800000> : vector<8xf32>
    %6 = vector.multi_reduction <maximumf>, %2, %cst_4 [1] : vector<8x256xf32> to vector<8xf32>
    %7 = vector.shape_cast %6 : vector<8xf32> to vector<8x1xf32>
    %8 = vector.broadcast %7 : vector<8x1xf32> to vector<8x256xf32>
    %9 = arith.subf %2, %8 : vector<8x256xf32>
    %10 = math.exp %9 : vector<8x256xf32>
    %cst_5 = arith.constant dense<0.000000e+00> : vector<8xf32>
    %11 = vector.multi_reduction <add>, %10, %cst_5 [1] : vector<8x256xf32> to vector<8xf32>
    %12 = vector.shape_cast %11 : vector<8xf32> to vector<8x1xf32>
    %13 = math.log %12 : vector<8x1xf32>
    %cst_6 = arith.constant dense<0xFF800000> : vector<8xf32>
    %14 = vector.multi_reduction <maximumf>, %5, %cst_6 [1] : vector<8x256xf32> to vector<8xf32>
    %15 = vector.shape_cast %14 : vector<8xf32> to vector<8x1xf32>
    %16 = vector.broadcast %15 : vector<8x1xf32> to vector<8x256xf32>
    %17 = arith.subf %5, %16 : vector<8x256xf32>
    %18 = math.exp %17 : vector<8x256xf32>
    %cst_7 = arith.constant dense<0.000000e+00> : vector<8xf32>
    %19 = vector.multi_reduction <add>, %18, %cst_7 [1] : vector<8x256xf32> to vector<8xf32>
    %20 = vector.shape_cast %19 : vector<8xf32> to vector<8x1xf32>
    %21 = math.log %20 : vector<8x1xf32>
    %cst_8 = arith.constant 1.000000e+00 : f32
    %22 = vector.broadcast %cst_8 : f32 to vector<8x1xf32>
    %23 = arith.divf %22, %20 : vector<8x1xf32>
    %24 = vector.broadcast %23 : vector<8x1xf32> to vector<8x256xf32>
    %25 = arith.mulf %18, %24 : vector<8x256xf32>
    %26 = arith.subf %17, %9 : vector<8x256xf32>
    %27 = arith.subf %13, %21 : vector<8x1xf32>
    %28 = vector.broadcast %27 : vector<8x1xf32> to vector<8x256xf32>
    %29 = arith.addf %26, %28 : vector<8x256xf32>
    %30 = arith.mulf %25, %29 : vector<8x256xf32>
    %31 = vector.shape_cast %30 : vector<8x256xf32> to vector<1x8x256xf32>
    %cst_9 = arith.constant dense<0.000000e+00> : vector<1xf32>
    %32 = vector.multi_reduction <add>, %31, %cst_9 [1, 2] : vector<1x8x256xf32> to vector<1xf32>
    %33 = vector.shape_cast %32 : vector<1xf32> to vector<1x1x1xf32>
    %34 = vector.extract %33[0, 0, 0] : f32 from vector<1x1x1xf32>
    %35 = vector.broadcast %34 : f32 to vector<1x8x128xf32>
    %c0_10 = arith.constant 0 : index
    %c0_11 = arith.constant 0 : index
    %c0_12 = arith.constant 0 : index
    %36 = vector.load %arg3[%c0_10, %c0_11, %c0_12] : memref<1x8x128xf32, #tpu.memory_space<vmem>>, vector<1x8x128xf32>
    tpu.vector_store %arg3[%c0_10, %c0_11, %c0_12], %35 {strides = array<i32>} : memref<1x8x128xf32, #tpu.memory_space<vmem>>, vector<1x8x128xf32>,
    return
  }
  func.func @transform_0(%arg0: i32) -> (i32, i32) {
    %c0_i32 = arith.constant 0 : i32
    %c0_i32_0 = arith.constant 0 : i32
    return %arg0, %c0_i32 : i32, i32
  }
  func.func @transform_1(%arg0: i32) -> (i32, i32) {
    %c0_i32 = arith.constant 0 : i32
    %c0_i32_0 = arith.constant 0 : i32
    return %arg0, %c0_i32 : i32, i32
  }
  func.func @transform_2(%arg0: i32) -> (i32, i32, i32) {
    %c0_i32 = arith.constant 0 : i32
    %c0_i32_0 = arith.constant 0 : i32
    %c0_i32_1 = arith.constant 0 : i32
    return %arg0, %c0_i32, %c0_i32_0 : i32, i32, i32
  }
}

</mosaic_0001>

<llo_original>
// kernel: tpu_custom_call.1
$region0: #{tpu_custom_call.1}
  #allocation0 [shape = 'u32[]', space=smem, size = 0x4, offset = 0x4, fixed_abs, tag = 'smem constant byte address 0x4 - core index']
  #allocation1 [shape = 'u32[144,128]{1,0:T(1,128)}', space=vmem, size = 0x12000, scoped, tag = 'internal scratch']
  %s0 = inlined_call_operand.hbm [shape: f32[8,256], index: 0, kind: input, shape index: {}]
  %s1 = inlined_call_operand.hbm [shape: f32[8,256], index: 1, kind: input, shape index: {}]
  %s2 = inlined_call_operand.hbm [shape: f32[1,8,128], index: 2, kind: output, shape index: {}]
  %s3 = sld [smem:[#allocation0]]
  $region26: #{tpu_custom_call.1} parent=0
    _
  %s5 = ssub.s32 1, %s3
  %s6 = scalar_select 0, %s5, %s3
  $region1: #{tpu_custom_call.1} parent=0
    #allocation2 [shape = 'u8[8192]{0}', space=vmem, size = 0x2000, scoped, tag = 'input window, operand 0, single buffered']
    #allocation3 [shape = 's32[1]{0}', space=sflag, size = 0x4, scoped, tag = 'scoped memory for tpu_custom_call.1']
    #allocation4 [shape = 's32[1]{0}', space=sflag, size = 0x4, scoped, tag = 'scoped memory for tpu_custom_call.1']
    #allocation5 [shape = 'u8[8192]{0}', space=vmem, size = 0x2000, scoped, tag = 'input window, operand 1, single buffered']
    #allocation6 [shape = 's32[1]{0}', space=sflag, size = 0x4, scoped, tag = 'scoped memory for tpu_custom_call.1']
    #allocation7 [shape = 'u8[4096]{0}', space=vmem, size = 0x1000, scoped, tag = 'output window, operand 0, single buffered']
    %7 = vsyncpa [#allocation3], 0
    %8 = vsyncpa [#allocation6], 0
    %9 = vsyncpa [#allocation4], 0
    // Predicated region
    $region2: #{tpu_custom_call.1} parent=1 // pred_check
      _
    $region3: #{tpu_custom_call.1} parent=1 // pred_check_branch
      %11 = sbr.rel (0) target = $region5
    $region4: #{tpu_custom_call.1} parent=1 // pred_region
      %s13 = ssub.s32 256, 256
      %14 = vsyncadd [#allocation3], %s13
      %s16 = sshll.u32 [#allocation2], 4
      %s17 = int_to_ptr.vmem [resolvable:$true] %s16
      %19 = dma.hbm_to_vmem [thread:$0]  %s0, 256, %s17, [#allocation3]
    $region5: #{tpu_custom_call.1} parent=1 // pred_fallthru
      _
    // Predicated region
    $region6: #{tpu_custom_call.1} parent=1 // pred_check
      _
    $region7: #{tpu_custom_call.1} parent=1 // pred_check_branch
      %21 = sbr.rel (0) target = $region9
    $region8: #{tpu_custom_call.1} parent=1 // pred_region
      %s23 = ssub.s32 256, 256
      %24 = vsyncadd [#allocation6], %s23
      %s26 = sshll.u32 [#allocation5], 4
      %s27 = int_to_ptr.vmem [resolvable:$true] %s26
      %29 = dma.hbm_to_vmem [thread:$0]  %s1, 256, %s27, [#allocation6]
    $region9: #{tpu_custom_call.1} parent=1 // pred_fallthru
      _
    // Predicated region
    $region10: #{tpu_custom_call.1} parent=1 // pred_check
      _
    $region11: #{tpu_custom_call.1} parent=1 // pred_check_branch
      %31 = sbr.rel (0) target = $region13
    $region12: #{tpu_custom_call.1} parent=1 // pred_region
      %32 = dma.done [#allocation3], 256
    $region13: #{tpu_custom_call.1} parent=1 // pred_fallthru
      _
    // Predicated region
    $region14: #{tpu_custom_call.1} parent=1 // pred_check
      _
    $region15: #{tpu_custom_call.1} parent=1 // pred_check_branch
      %34 = sbr.rel (0) target = $region17
    $region16: #{tpu_custom_call.1} parent=1 // pred_region
      %35 = dma.done [#allocation6], 256
    $region17: #{tpu_custom_call.1} parent=1 // pred_fallthru
      _
    %v36 = vld [vmem:[#allocation2] sm:$0xff]
    %v37 = vld [vmem:[#allocation2 + $0x8] sm:$0xff]
    %v38 = vmul.f32 %v36, 0.5
    %v39 = vmul.f32 %v37, 0.5
    %v40 = vld [vmem:[#allocation5] sm:$0xff]
    %v41 = vld [vmem:[#allocation5 + $0x8] sm:$0xff]
    %v42 = vmul.f32 %v40, 0.5
    %v43 = vmul.f32 %v41, 0.5
    %v44 = vmax.f32 %v38, %v39
    %45 = vmax.xlane.f32.xlu0 %v44
    %v46 = vpop.xlane.xlu0 %45
    %v47 = vsub.f32 %v38, %v46
    %v48 = vsub.f32 %v39, %v46
    %v49 = vmul.f32 %v47, 1.442695
    %v50 = vpow.pop %v49
    %v51 = vmul.f32 %v48, 1.442695
    %v52 = vpow.pop %v51
    %v53 = vadd.f32 %v50, %v52
    %54 = vadd.xlane.f32.xlu0 %v53
    %v55 = vpop.xlane.xlu0 %54
    %v56 = vlog2.pop %v55
    %v57 = vmul.f32 %v56, 0.6931472
    %v58 = vmax.f32 %v42, %v43
    %59 = vmax.xlane.f32.xlu0 %v58
    %v60 = vpop.xlane.xlu0 %59
    %v61 = vsub.f32 %v42, %v60
    %v62 = vsub.f32 %v43, %v60
    %v63 = vmul.f32 %v61, 1.442695
    %v64 = vpow.pop %v63
    %v65 = vmul.f32 %v62, 1.442695
    %v66 = vpow.pop %v65
    %v67 = vadd.f32 %v64, %v66
    %68 = vadd.xlane.f32.xlu0 %v67
    %v69 = vpop.xlane.xlu0 %68
    %v70 = vlog2.pop %v69
    %v71 = vmul.f32 %v70, 0.6931472
    %v72 = vrcp.pop %v69
    %v73 = vmul.f32 1.0, %v72
    %v74 = vmul.f32 %v64, %v73
    %v75 = vmul.f32 %v66, %v73
    %v76 = vsub.f32 %v61, %v47
    %v77 = vsub.f32 %v62, %v48
    %v78 = vsub.f32 %v57, %v71
    %v79 = vadd.f32 %v76, %v78
    %v80 = vadd.f32 %v77, %v78
    %v81 = vmul.f32 %v74, %v79
    %v82 = vmul.f32 %v75, %v80
    %v83 = vadd.f32 %v81, %v82
    %84 = vadd.xlane.f32.xlu0 %v83
    %v85 = vpop.xlane.xlu0 %84
    %v86 = vrot.slane %v85, 4
    %v87 = vadd.f32 %v85, %v86
    %v88 = vrot.slane %v87, 2
    %v89 = vadd.f32 %v87, %v88
    %v90 = vrot.slane %v89, 1
    %v91 = vadd.f32 %v89, %v90
    %s92 = vtos %v91
    %v93 = vstv %s92
    %94 = vst [vmem:[#allocation7] sm:$0xff] %v93
    // Predicated region
    $region18: #{tpu_custom_call.1} parent=1 // pred_check
      _
    $region19: #{tpu_custom_call.1} parent=1 // pred_check_branch
      %96 = sbr.rel (0) target = $region21
    $region20: #{tpu_custom_call.1} parent=1 // pred_region
      %s98 = ssub.s32 128, 128
      %99 = vsyncadd [#allocation4], %s98
      %s101 = sshll.u32 [#allocation7], 4
      %s102 = int_to_ptr.vmem [resolvable:$true] %s101
      %104 = dma.vmem_to_hbm [thread:$0]  %s102, 128, %s2, [#allocation4]
    $region21: #{tpu_custom_call.1} parent=1 // pred_fallthru
      _
    // Predicated region
    $region22: #{tpu_custom_call.1} parent=1 // pred_check
      _
    $region23: #{tpu_custom_call.1} parent=1 // pred_check_branch
      %106 = sbr.rel (0) target = $region25
    $region24: #{tpu_custom_call.1} parent=1 // pred_region
      %107 = dma.done [#allocation4], 128
    $region25: #{tpu_custom_call.1} parent=1 // pred_fallthru
      _
    %108 = vsyncpa [#allocation3], 1
    %109 = vsyncpa [#allocation6], 1
    %110 = vsyncpa [#allocation4], 1

</llo_original>
